<compile_context>
chip_gen: v7x
topology: tpu7x:2x2x1
jax: 0.10.0
libtpu: 0.0.40
codegen_flags: <defaults>
</compile_context>

<pallas_src>
import functools

import jax
import jax.numpy as jnp
from jax.experimental import pallas as pl
from jax.experimental.pallas import tpu as pltpu


def wp_softmax_kernel(w_ref, wp_ref):
    """wp = softmax(w, axis=-1). Runs once; hoisted out of the batch grid."""
    w = w_ref[...].astype(jnp.float32)
    w_max = jnp.max(w, axis=-1, keepdims=True)
    e = jnp.exp(w - w_max)
    inv = pl.reciprocal(jnp.sum(e, axis=-1, keepdims=True), approx=True)
    wp_ref[...] = (e * inv).astype(wp_ref.dtype)


def convmod_batch_kernel(xf_ref, wpf_ref, fcw_ref, out_ref, *, C, L):
    """Per batch tile: wFM reduce -> ReLU -> Linear (unrolled FMA) -> softmax.

    xf_ref : (TB, C*L)  lane-dense flattened signals
    wpf_ref: (1,  C*L)  flattened convex wFM weights
    fcw_ref: (C+1, K)   Linear weight with the bias folded in as row C
    out_ref: (TB, K)    class probabilities
    """
    tb = xf_ref.shape[0]
    k = fcw_ref.shape[1]

    # One lane-dense VPU multiply over the whole (C*L) feature axis.
    xw = xf_ref[...].astype(jnp.float32) * wpf_ref[...].astype(jnp.float32)
    fcw = fcw_ref[...].astype(jnp.float32)          # read resident weights once

    # Bias row (folded into fcw) initializes the logit accumulator.
    logits = jnp.broadcast_to(fcw[C:C + 1, :], (tb, k))
    # Unrolled VPU multiply-add over the small, static channel count (no MXU).
    for c in range(C):
        wfm_c = jnp.sum(xw[:, c * L:(c + 1) * L], axis=-1, keepdims=True)  # (TB, 1)
        r_c = jnp.maximum(wfm_c, 0.0)                                      # ReLU
        logits = logits + r_c * fcw[c:c + 1, :]

    # Numerically stable softmax over classes.
    m = jnp.max(logits, axis=-1, keepdims=True)
    e = jnp.exp(logits - m)
    probs = e * pl.reciprocal(jnp.sum(e, axis=-1, keepdims=True), approx=True)
    out_ref[...] = probs.astype(out_ref.dtype)


def _pick_batch_tile(B, CL, itemsize, target_bytes=2 * 1024 * 1024, cap=256):
    """Batch tile: multiple of 8; double-buffered x tile stays a few MiB (v7x-safe)."""
    tb = max(8, min(cap, target_bytes // max(1, 2 * CL * itemsize)))
    tb = max(8, (tb // 8) * 8)
    tb = min(tb, ((B + 7) // 8) * 8)
    return max(tb, 8)


def convmod_forward(x, w, fc_w, fc_b, *, batch_tile=None):
    """x: (B, C, L); w: (C, L); fc_w: (C, K) [in, out]; fc_b: (K,)."""
    B, C, L = x.shape
    K = fc_w.shape[1]
    CL = C * L

    # ---- Stage 1: convex weights wp = softmax(w) (independent of x / batch). ----
    vmem = pl.BlockSpec(memory_space=pltpu.MemorySpace.VMEM)
    wp = pl.pallas_call(
        wp_softmax_kernel,
        out_shape=jax.ShapeDtypeStruct((C, L), jnp.float32),
        in_specs=[vmem],
        out_specs=vmem,
    )(w)

    # ---- Stage 2: batched wFM + ReLU + Linear + softmax, gridded over B. ----
    if batch_tile is None:
        batch_tile = _pick_batch_tile(B, CL, jnp.dtype(x.dtype).itemsize)
    tb = batch_tile
    if tb >= B:
        tb = B                                  # single full-batch block, no padding
        b_pad = B
    else:
        tb = max(8, (tb // 8) * 8)              # sub-batch tiles must be 8-aligned
        b_pad = pl.cdiv(B, tb) * tb

    x_flat = x.reshape(B, CL)                   # lane-dense last dim
    if b_pad != B:
        x_flat = jnp.concatenate(
            [x_flat, jnp.zeros((b_pad - B, CL), x_flat.dtype)], axis=0)
    wp_flat = wp.reshape(1, CL)
    fcw_aug = jnp.concatenate(                  # bias folded in as row C
        [fc_w.astype(jnp.float32),
         fc_b.astype(jnp.float32).reshape(1, K)], axis=0)

    x_bytes = x_flat.size * jnp.dtype(x_flat.dtype).itemsize
    cost = pl.CostEstimate(
        flops=b_pad * (2 * CL + 2 * C * K + 4 * K),
        transcendentals=b_pad * K + C * L,
        bytes_accessed=x_bytes + (CL + (C + 1) * K + b_pad * K) * 4,
    )

    kernel = functools.partial(convmod_batch_kernel, C=C, L=L)
    out = pl.pallas_call(
        kernel,
        out_shape=jax.ShapeDtypeStruct((b_pad, K), jnp.float32),
        grid=(b_pad // tb,),
        in_specs=[
            pl.BlockSpec((tb, CL), lambda b: (b, 0)),     # x tile (pipelined)
            pl.BlockSpec((1, CL), lambda b: (0, 0)),      # wp (resident)
            pl.BlockSpec((C + 1, K), lambda b: (0, 0)),   # fc weight+bias (resident)
        ],
        out_specs=pl.BlockSpec((tb, K), lambda b: (b, 0)),
        compiler_params=pltpu.CompilerParams(
            dimension_semantics=("parallel",),            # v7x: 2 TCs share batch grid
            vmem_limit_bytes=32 * 1024 * 1024,
        ),
        cost_estimate=cost,
    )(x_flat, wp_flat, fcw_aug)

    if b_pad != B:
        out = out[:B]
    return out, wp


if __name__ == "__main__":
    # Small shapes: num_insigs=4, signal_len=16, num_classes=10, batch=50.
    B, C, L, NUM_CLASSES = 50, 4, 16, 10

    key = jax.random.PRNGKey(0)
    k1, k2, k3, k4 = jax.random.split(key, 4)

    x = jax.random.normal(k1, (B, C, L), dtype=jnp.float32)
    w = 0.1 * jax.random.normal(k2, (C, L), dtype=jnp.float32)        # wFM conv weights
    fc_w = jax.random.normal(k3, (C, NUM_CLASSES), dtype=jnp.float32) / jnp.sqrt(
        jnp.float32(C))                                                # Linear weight (in, out)
    fc_b = 0.01 * jax.random.normal(k4, (NUM_CLASSES,), dtype=jnp.float32)

    # batch_tile=16 exercises the tiled + padded grid path (grid of 4, pad 50 -> 64).
    fwd = jax.jit(functools.partial(convmod_forward, batch_tile=16))
    out, wp = fwd(x, w, fc_w, fc_b)
    jax.block_until_ready((out, wp))

    assert out.shape == (B, NUM_CLASSES)
    assert wp.shape == (C, L)

    # Pure-JAX reference (loose tolerance: approx=True EUP reciprocals in kernel).
    wp_r = jax.nn.softmax(w, axis=-1)
    wfm_r = jnp.sum(x * wp_r[None], axis=-1)
    out_r = jax.nn.softmax(jnp.maximum(wfm_r, 0.0) @ fc_w + fc_b, axis=-1)
    assert float(jnp.max(jnp.abs(wp - wp_r))) < 5e-3
    assert float(jnp.max(jnp.abs(out - out_r))) < 5e-3
    print("KERNEL_OK")
</pallas_src>

<mosaic_0001>
module attributes {stable_mosaic.version = 11 : i64} {
  func.func @wp_softmax_kernel(%arg0: memref<4x16xf32, #tpu.memory_space<vmem>>, %arg1: memref<4x16xf32, #tpu.memory_space<vmem>>) attributes {dimension_semantics = [], scalar_prefetch = 0 : i64, scratch_operands = 0 : i64, tpu.core_type = #tpu.core_type<tc>} {
    %c0 = arith.constant 0 : index
    %c0_0 = arith.constant 0 : index
    %0 = vector.load %arg0[%c0, %c0_0] : memref<4x16xf32, #tpu.memory_space<vmem>>, vector<4x16xf32>
    %cst = arith.constant dense<0xFF800000> : vector<4xf32>
    %1 = vector.multi_reduction <maximumf>, %0, %cst [1] : vector<4x16xf32> to vector<4xf32>
    %2 = vector.shape_cast %1 : vector<4xf32> to vector<4x1xf32>
    %3 = vector.broadcast %2 : vector<4x1xf32> to vector<4x16xf32>
    %4 = arith.subf %0, %3 : vector<4x16xf32>
    %5 = math.exp %4 : vector<4x16xf32>
    %cst_1 = arith.constant dense<0.000000e+00> : vector<4xf32>
    %6 = vector.multi_reduction <add>, %5, %cst_1 [1] : vector<4x16xf32> to vector<4xf32>
    %7 = vector.shape_cast %6 : vector<4xf32> to vector<4x1xf32>
    %8 = tpu.reciprocal %7 {approx = true} : vector<4x1xf32> -> vector<4x1xf32>
    %9 = vector.broadcast %8 : vector<4x1xf32> to vector<4x16xf32>
    %10 = arith.mulf %5, %9 : vector<4x16xf32>
    %c0_2 = arith.constant 0 : index
    %c0_3 = arith.constant 0 : index
    %11 = vector.load %arg1[%c0_2, %c0_3] : memref<4x16xf32, #tpu.memory_space<vmem>>, vector<4x16xf32>
    tpu.vector_store %arg1[%c0_2, %c0_3], %10 {strides = array<i32>} : memref<4x16xf32, #tpu.memory_space<vmem>>, vector<4x16xf32>,
    return
  }
}

module attributes {stable_mosaic.version = 11 : i64} {
  func.func @convmod_batch_kernel(%arg0: i32, %arg1: memref<16x64xf32, #tpu.memory_space<vmem>>, %arg2: memref<1x64xf32, #tpu.memory_space<vmem>>, %arg3: memref<5x10xf32, #tpu.memory_space<vmem>>, %arg4: memref<16x10xf32, #tpu.memory_space<vmem>>) attributes {dimension_semantics = [#tpu.dimension_semantics<parallel>], iteration_bounds = array<i64: 4>, scalar_prefetch = 0 : i64, scratch_operands = 0 : i64, tpu.core_type = #tpu.core_type<tc>, window_params = [{transform_indices = @transform_0, window_bounds = array<i64: 16, 64>}, {pipeline_mode = #tpu.pipeline_mode<synchronous>, transform_indices = @transform_1, window_bounds = array<i64: 1, 64>}, {pipeline_mode = #tpu.pipeline_mode<synchronous>, transform_indices = @transform_2, window_bounds = array<i64: 5, 10>}, {transform_indices = @transform_3, window_bounds = array<i64: 16, 10>}]} {
    %c0 = arith.constant 0 : index
    %c0_0 = arith.constant 0 : index
    %0 = vector.load %arg1[%c0, %c0_0] : memref<16x64xf32, #tpu.memory_space<vmem>>, vector<16x64xf32>
    %c0_1 = arith.constant 0 : index
    %c0_2 = arith.constant 0 : index
    %1 = vector.load %arg2[%c0_1, %c0_2] : memref<1x64xf32, #tpu.memory_space<vmem>>, vector<1x64xf32>
    %2 = vector.broadcast %1 : vector<1x64xf32> to vector<16x64xf32>
    %3 = arith.mulf %0, %2 : vector<16x64xf32>
    %c0_3 = arith.constant 0 : index
    %c0_4 = arith.constant 0 : index
    %4 = vector.load %arg3[%c0_3, %c0_4] : memref<5x10xf32, #tpu.memory_space<vmem>>, vector<5x10xf32>
    %5 = vector.extract_strided_slice %4 {offsets = [4, 0], sizes = [1, 10], strides = [1, 1]} : vector<5x10xf32> to vector<1x10xf32>
    %6 = vector.shape_cast %5 : vector<1x10xf32> to vector<1x10xf32>
    %7 = vector.broadcast %6 : vector<1x10xf32> to vector<16x10xf32>
    %8 = vector.extract_strided_slice %3 {offsets = [0, 0], sizes = [16, 16], strides = [1, 1]} : vector<16x64xf32> to vector<16x16xf32>
    %cst = arith.constant dense<0.000000e+00> : vector<16xf32>
    %9 = vector.multi_reduction <add>, %8, %cst [1] : vector<16x16xf32> to vector<16xf32>
    %10 = vector.shape_cast %9 : vector<16xf32> to vector<16x1xf32>
    %cst_5 = arith.constant 0.000000e+00 : f32
    %11 = vector.broadcast %cst_5 : f32 to vector<16x1xf32>
    %12 = arith.maximumf %10, %11 : vector<16x1xf32>
    %13 = vector.extract_strided_slice %4 {offsets = [0, 0], sizes = [1, 10], strides = [1, 1]} : vector<5x10xf32> to vector<1x10xf32>
    %14 = vector.broadcast %12 : vector<16x1xf32> to vector<16x10xf32>
    %15 = vector.broadcast %13 : vector<1x10xf32> to vector<16x10xf32>
    %16 = arith.mulf %14, %15 : vector<16x10xf32>
    %17 = arith.addf %7, %16 : vector<16x10xf32>
    %18 = vector.extract_strided_slice %3 {offsets = [0, 16], sizes = [16, 16], strides = [1, 1]} : vector<16x64xf32> to vector<16x16xf32>
    %cst_6 = arith.constant dense<0.000000e+00> : vector<16xf32>
    %19 = vector.multi_reduction <add>, %18, %cst_6 [1] : vector<16x16xf32> to vector<16xf32>
    %20 = vector.shape_cast %19 : vector<16xf32> to vector<16x1xf32>
    %cst_7 = arith.constant 0.000000e+00 : f32
    %21 = vector.broadcast %cst_7 : f32 to vector<16x1xf32>
    %22 = arith.maximumf %20, %21 : vector<16x1xf32>
    %23 = vector.extract_strided_slice %4 {offsets = [1, 0], sizes = [1, 10], strides = [1, 1]} : vector<5x10xf32> to vector<1x10xf32>
    %24 = vector.broadcast %22 : vector<16x1xf32> to vector<16x10xf32>
    %25 = vector.broadcast %23 : vector<1x10xf32> to vector<16x10xf32>
    %26 = arith.mulf %24, %25 : vector<16x10xf32>
    %27 = arith.addf %17, %26 : vector<16x10xf32>
    %28 = vector.extract_strided_slice %3 {offsets = [0, 32], sizes = [16, 16], strides = [1, 1]} : vector<16x64xf32> to vector<16x16xf32>
    %cst_8 = arith.constant dense<0.000000e+00> : vector<16xf32>
    %29 = vector.multi_reduction <add>, %28, %cst_8 [1] : vector<16x16xf32> to vector<16xf32>
    %30 = vector.shape_cast %29 : vector<16xf32> to vector<16x1xf32>
    %cst_9 = arith.constant 0.000000e+00 : f32
    %31 = vector.broadcast %cst_9 : f32 to vector<16x1xf32>
    %32 = arith.maximumf %30, %31 : vector<16x1xf32>
    %33 = vector.extract_strided_slice %4 {offsets = [2, 0], sizes = [1, 10], strides = [1, 1]} : vector<5x10xf32> to vector<1x10xf32>
    %34 = vector.broadcast %32 : vector<16x1xf32> to vector<16x10xf32>
    %35 = vector.broadcast %33 : vector<1x10xf32> to vector<16x10xf32>
    %36 = arith.mulf %34, %35 : vector<16x10xf32>
    %37 = arith.addf %27, %36 : vector<16x10xf32>
    %38 = vector.extract_strided_slice %3 {offsets = [0, 48], sizes = [16, 16], strides = [1, 1]} : vector<16x64xf32> to vector<16x16xf32>
    %cst_10 = arith.constant dense<0.000000e+00> : vector<16xf32>
    %39 = vector.multi_reduction <add>, %38, %cst_10 [1] : vector<16x16xf32> to vector<16xf32>
    %40 = vector.shape_cast %39 : vector<16xf32> to vector<16x1xf32>
    %cst_11 = arith.constant 0.000000e+00 : f32
    %41 = vector.broadcast %cst_11 : f32 to vector<16x1xf32>
    %42 = arith.maximumf %40, %41 : vector<16x1xf32>
    %43 = vector.extract_strided_slice %4 {offsets = [3, 0], sizes = [1, 10], strides = [1, 1]} : vector<5x10xf32> to vector<1x10xf32>
    %44 = vector.broadcast %42 : vector<16x1xf32> to vector<16x10xf32>
    %45 = vector.broadcast %43 : vector<1x10xf32> to vector<16x10xf32>
    %46 = arith.mulf %44, %45 : vector<16x10xf32>
    %47 = arith.addf %37, %46 : vector<16x10xf32>
    %cst_12 = arith.constant dense<0xFF800000> : vector<16xf32>
    %48 = vector.multi_reduction <maximumf>, %47, %cst_12 [1] : vector<16x10xf32> to vector<16xf32>
    %49 = vector.shape_cast %48 : vector<16xf32> to vector<16x1xf32>
    %50 = vector.broadcast %49 : vector<16x1xf32> to vector<16x10xf32>
    %51 = arith.subf %47, %50 : vector<16x10xf32>
    %52 = math.exp %51 : vector<16x10xf32>
    %cst_13 = arith.constant dense<0.000000e+00> : vector<16xf32>
    %53 = vector.multi_reduction <add>, %52, %cst_13 [1] : vector<16x10xf32> to vector<16xf32>
    %54 = vector.shape_cast %53 : vector<16xf32> to vector<16x1xf32>
    %55 = tpu.reciprocal %54 {approx = true} : vector<16x1xf32> -> vector<16x1xf32>
    %56 = vector.broadcast %55 : vector<16x1xf32> to vector<16x10xf32>
    %57 = arith.mulf %52, %56 : vector<16x10xf32>
    %c0_14 = arith.constant 0 : index
    %c0_15 = arith.constant 0 : index
    %58 = vector.load %arg4[%c0_14, %c0_15] : memref<16x10xf32, #tpu.memory_space<vmem>>, vector<16x10xf32>
    tpu.vector_store %arg4[%c0_14, %c0_15], %57 {strides = array<i32>} : memref<16x10xf32, #tpu.memory_space<vmem>>, vector<16x10xf32>,
    return
  }
  func.func @transform_0(%arg0: i32) -> (i32, i32) {
    %c0_i32 = arith.constant 0 : i32
    %c0_i32_0 = arith.constant 0 : i32
    return %arg0, %c0_i32 : i32, i32
  }
  func.func @transform_1(%arg0: i32) -> (i32, i32) {
    %c0_i32 = arith.constant 0 : i32
    %c0_i32_0 = arith.constant 0 : i32
    %c0_i32_1 = arith.constant 0 : i32
    return %c0_i32, %c0_i32_0 : i32, i32
  }
  func.func @transform_2(%arg0: i32) -> (i32, i32) {
    %c0_i32 = arith.constant 0 : i32
    %c0_i32_0 = arith.constant 0 : i32
    %c0_i32_1 = arith.constant 0 : i32
    return %c0_i32, %c0_i32_0 : i32, i32
  }
  func.func @transform_3(%arg0: i32) -> (i32, i32) {
    %c0_i32 = arith.constant 0 : i32
    %c0_i32_0 = arith.constant 0 : i32
    return %arg0, %c0_i32 : i32, i32
  }
}

</mosaic_0001>

<llo_original>
// kernel: convmod_forward.2
$region0: #{convmod_forward.2}
  #allocation0 [shape = 'u32[]', space=smem, size = 0x4, offset = 0x4, fixed_abs, tag = 'smem constant byte address 0x4 - core index']
  #allocation1 [shape = 'u32[144,128]{1,0:T(1,128)}', space=vmem, size = 0x12000, scoped, tag = 'internal scratch']
  %s0 = inlined_call_operand.vmem [shape: f32[4,16], index: 0, kind: input, shape index: {}]
  %s1 = inlined_call_operand.vmem [shape: f32[4,16], index: 1, kind: output, shape index: {}]
  %s2 = sld [smem:[#allocation0]]
  $region14: #{convmod_forward.2} parent=0
    _
  %s4 = ssub.s32 1, %s2
  %s5 = scalar_select 0, %s4, %s2
  // Predicated region
  $region2: #{convmod_forward.2} parent=0 // pred_check
    _
  $region3: #{convmod_forward.2} parent=0 // pred_check_branch
    %7 = sbr.rel (0) target = $region5
  $region4: #{convmod_forward.2} parent=0 // pred_region
    _
  $region5: #{convmod_forward.2} parent=0 // pred_fallthru
    _
  %v8 = vld [vmem:[%s0] sm:$0xf]
  %vm9 = vcmask 125952
  %v10 = vsel %vm9, %v8, -inf
  %11 = vmax.xlane.f32.xlu0 %v10
  %v12 = vpop.xlane.xlu0 %11
  %v13 = vsub.f32 %v8, %v12
  %v14 = vmul.f32 %v13, 1.442695
  %v15 = vpow.pop %v14
  %v16 = vsel %vm9, %v15, 0.0
  %17 = vadd.xlane.f32.xlu0 %v16
  %v18 = vpop.xlane.xlu0 %17
  %v19 = vrcp.pop %v18
  %v20 = vmul.f32 %v15, %v19
  %21 = vst.msk [vmem:[%s1] sm:$0xf] %vm9, %v20
  // Predicated region
  $region6: #{convmod_forward.2} parent=0 // pred_check
    _
  $region7: #{convmod_forward.2} parent=0 // pred_check_branch
    %23 = sbr.rel (0) target = $region9
  $region8: #{convmod_forward.2} parent=0 // pred_region
    _
  $region9: #{convmod_forward.2} parent=0 // pred_fallthru
    _
  // Predicated region
  $region10: #{convmod_forward.2} parent=0 // pred_check
    _
  $region11: #{convmod_forward.2} parent=0 // pred_check_branch
    %25 = sbr.rel (0) target = $region13
  $region12: #{convmod_forward.2} parent=0 // pred_region
    _
  $region13: #{convmod_forward.2} parent=0 // pred_fallthru
    _

// kernel: convmod_forward.3
$region0: #{convmod_forward.3}
  #allocation0 [shape = 'u32[]', space=smem, size = 0x4, offset = 0x4, fixed_abs, tag = 'smem constant byte address 0x4 - core index']
  #allocation1 [shape = 'u32[144,128]{1,0:T(1,128)}', space=vmem, size = 0x12000, scoped, tag = 'internal scratch']
  %s0 = inlined_call_operand.vmem [shape: f32[64,64], index: 0, kind: input, shape index: {}]
  %s1 = inlined_call_operand.vmem [shape: f32[1,64], index: 1, kind: input, shape index: {}]
  %s2 = inlined_call_operand.vmem [shape: f32[5,10], index: 2, kind: input, shape index: {}]
  %s3 = inlined_call_operand.vmem [shape: f32[64,10], index: 3, kind: output, shape index: {}]
  %s4 = sld [smem:[#allocation0]]
  $region45: #{convmod_forward.3} parent=0
    _
  %s6 = ssub.s32 1, %s4
  %s7 = scalar_select 0, %s6, %s4
  loop: start=0, step=1, limit=6
  $region2: #{convmod_forward.3} parent=0 // loop_pre_header
    _
  $region3: #{convmod_forward.3} parent=0 // loop_header
    %s9 = sphi 0, %s13
    %p10 = scmp.ge.s32.totalorder %s9, 6
    %s19 = sphi 0, %s21
    %s22 = sphi 0, %s19
    %s23 = sphi 0, %s22
    %s39 = sphi 0, %s23
    %s43 = sphi 0, %s43
    %s45 = sphi 0, %s43
    %s46 = sphi 0, %s45
    %s60 = sphi 0, %s46
    %s64 = sphi 0, %s64
    %s66 = sphi 0, %s64
    %s67 = sphi 0, %s66
    %s81 = sphi 0, %s67
    %s87 = sphi 0, %s89
    %s90 = sphi 0, %s87
    %s91 = sphi 0, %s90
    %s107 = sphi 0, %s91
  $region4: #{convmod_forward.3} parent=0 // loop_header_branch
    %12 = sbr.rel (%p10) target = $region8
  $region5: #{convmod_forward.3} parent=0 // loop_body
    %s14 = ssub.s32 %s9, 1
    %s15 = ssub.s32 %s9, 2
    %s16 = sadd.s32 %s9, 1
    %s17 = ssub.s32 %s9, %s16
    %p18 = scmp.eq.s32.totalorder %s17, 0
    %s20 = sadd.s32 %s19, 1
    %s21 = scalar_select %p18, %s19, %s20
    %p24 = pneg %p18
    %p25 = scmp.eq.s32.totalorder %s9, 3
    %p26 = por %p24, %p25
    %p27 = scmp.ne.s32.totalorder %s19, %s22
    %p28 = scmp.eq.s32.totalorder %s9, 0
    %p29 = por %p27, %p28
    %p30 = scmp.ne.s32.totalorder %s19, %s22
    %p31 = scmp.eq.s32.totalorder %s14, 3
    %p32 = por %p30, %p31
    %p33 = scmp.ne.s32.totalorder %s22, %s23
    %p34 = scmp.eq.s32.totalorder %s14, 0
    %p35 = por %p33, %p34
    %p36 = scmp.ne.s32.totalorder %s22, %s23
    %p37 = scmp.eq.s32.totalorder %s15, 3
    %p38 = por %p36, %p37
    %p40 = scmp.ne.s32.totalorder %s23, %s39
    %p41 = scmp.eq.s32.totalorder %s15, 0
    %p42 = por %p40, %p41
    %s44 = sadd.s32 %s43, 1
    %p47 = scmp.eq.s32.totalorder %s9, 3
    %p48 = scmp.ne.s32.totalorder %s43, %s45
    %p49 = scmp.eq.s32.totalorder %s9, 0
    %p50 = por %p48, %p49
    %p51 = scmp.ne.s32.totalorder %s43, %s45
    %p52 = scmp.eq.s32.totalorder %s14, 3
    %p53 = por %p51, %p52
    %p54 = scmp.ne.s32.totalorder %s45, %s46
    %p55 = scmp.eq.s32.totalorder %s14, 0
    %p56 = por %p54, %p55
    %p57 = scmp.ne.s32.totalorder %s45, %s46
    %p58 = scmp.eq.s32.totalorder %s15, 3
    %p59 = por %p57, %p58
    %p61 = scmp.ne.s32.totalorder %s46, %s60
    %p62 = scmp.eq.s32.totalorder %s15, 0
    %p63 = por %p61, %p62
    %s65 = sadd.s32 %s64, 1
    %p68 = scmp.eq.s32.totalorder %s9, 3
    %p69 = scmp.ne.s32.totalorder %s64, %s66
    %p70 = scmp.eq.s32.totalorder %s9, 0
    %p71 = por %p69, %p70
    %p72 = scmp.ne.s32.totalorder %s64, %s66
    %p73 = scmp.eq.s32.totalorder %s14, 3
    %p74 = por %p72, %p73
    %p75 = scmp.ne.s32.totalorder %s66, %s67
    %p76 = scmp.eq.s32.totalorder %s14, 0
    %p77 = por %p75, %p76
    %p78 = scmp.ne.s32.totalorder %s66, %s67
    %p79 = scmp.eq.s32.totalorder %s15, 3
    %p80 = por %p78, %p79
    %p82 = scmp.ne.s32.totalorder %s67, %s81
    %p83 = scmp.eq.s32.totalorder %s15, 0
    %p84 = por %p82, %p83
    %s85 = ssub.s32 %s9, %s16
    %p86 = scmp.eq.s32.totalorder %s85, 0
    %s88 = sadd.s32 %s87, 1
    %s89 = scalar_select %p86, %s87, %s88
    %p92 = pneg %p86
    %p93 = scmp.eq.s32.totalorder %s9, 3
    %p94 = por %p92, %p93
    %p95 = scmp.ne.s32.totalorder %s87, %s90
    %p96 = scmp.eq.s32.totalorder %s9, 0
    %p97 = por %p95, %p96
    %p98 = scmp.ne.s32.totalorder %s87, %s90
    %p99 = scmp.eq.s32.totalorder %s14, 3
    %p100 = por %p98, %p99
    %p101 = scmp.ne.s32.totalorder %s90, %s91
    %p102 = scmp.eq.s32.totalorder %s14, 0
    %p103 = por %p101, %p102
    %p104 = scmp.ne.s32.totalorder %s90, %s91
    %p105 = scmp.eq.s32.totalorder %s15, 3
    %p106 = por %p104, %p105
    %p108 = scmp.ne.s32.totalorder %s91, %s107
    %p109 = scmp.eq.s32.totalorder %s15, 0
    %p110 = por %p108, %p109
    %p111 = scmp.le.s32.totalorder 1, %s9
    %p112 = scmp.lt.s32.totalorder %s9, 5
    %p113 = pnand %p111, %p112
    %p114 = pneg %p113
    // Predicated region
    $region9: #{convmod_forward.3} parent=5 // pred_check
      _
    $region10: #{convmod_forward.3} parent=5 // pred_check_branch
      %116 = sbr.rel (%p113) target = $region12
    $region11: #{convmod_forward.3} parent=5 // pred_region
      %s117 = ssub.s32 %s9, 1
      // Predicated region
      $region13: #{convmod_forward.3} parent=11 // pred_check
        %p118 = pneg %p56
      $region14: #{convmod_forward.3} parent=11 // pred_check_branch
        %120 = sbr.rel (%p118) target = $region16
      $region15: #{convmod_forward.3} parent=11 // pred_region
        _
      $region16: #{convmod_forward.3} parent=11 // pred_fallthru
        _
      // Predicated region
      $region17: #{convmod_forward.3} parent=11 // pred_check
        %p121 = pneg %p77
      $region18: #{convmod_forward.3} parent=11 // pred_check_branch
        %123 = sbr.rel (%p121) target = $region20
      $region19: #{convmod_forward.3} parent=11 // pred_region
        _
      $region20: #{convmod_forward.3} parent=11 // pred_fallthru
        _
    $region12: #{convmod_forward.3} parent=5 // pred_fallthru
      _
    %p124 = scmp.lt.s32.totalorder %s9, 4
    // Predicated region
    $region21: #{convmod_forward.3} parent=5 // pred_check
      %p125 = pneg %p124
    $region22: #{convmod_forward.3} parent=5 // pred_check_branch
      %127 = sbr.rel (%p125) target = $region24
    $region23: #{convmod_forward.3} parent=5 // pred_region
      // Predicated region
      $region25: #{convmod_forward.3} parent=23 // pred_check
        %p128 = pneg %p29
      $region26: #{convmod_forward.3} parent=23 // pred_check_branch
        %130 = sbr.rel (%p128) target = $region28
      $region27: #{convmod_forward.3} parent=23 // pred_region
        %s131 = smul.u32 2, %s9
        %p132 = scmp.lt.s32.totalorder %s131, 7
        %s133 = scalar_select %p132, %s131, 7
        %s134 = smul.addr %s133, 8
        %s135 = scalar_lea.vmem %s0, %s134
        %s136 = smul.u32 2, %s9
      $region28: #{convmod_forward.3} parent=23 // pred_fallthru
        _
    $region24: #{convmod_forward.3} parent=5 // pred_fallthru
      _
    %p137 = scmp.le.s32.totalorder 1, %s9
    %p138 = scmp.lt.s32.totalorder %s9, 5
    %p139 = pnand %p137, %p138
    %p140 = pneg %p139
    // Predicated region
    $region29: #{convmod_forward.3} parent=5 // pred_check
      _
    $region30: #{convmod_forward.3} parent=5 // pred_check_branch
      %142 = sbr.rel (%p139) target = $region32
    $region31: #{convmod_forward.3} parent=5 // pred_region
      %s143 = ssub.s32 %s9, 1
      %s144 = smul.u32 2, %s14
      %p145 = scmp.lt.s32.totalorder %s144, 7
      %s146 = scalar_select %p145, %s144, 7
      %s147 = smul.addr %s146, 8
      %s148 = scalar_lea.vmem %s0, %s147
      %p149 = pneg %p35
      %p150 = pneg %p32
      %p151 = pneg %p56
      %p152 = pneg %p53
      %p153 = pneg %p77
      %p154 = pneg %p74
      %p155 = pneg %p103
      %p156 = pneg %p100
      %s157 = smul.u32 2, %s14
      %p158 = scmp.lt.s32.totalorder %s157, 7
      %s159 = scalar_select %p158, %s157, 7
      %s160 = smul.addr %s159, 8
      %s161 = scalar_lea.vmem %s3, %s160
      %s162 = smul.u32 2, %s14
      %p163 = scmp.lt.s32.totalorder %s162, 7
      %s164 = scalar_select %p163, %s162, 7
      %s165 = smul.addr %s164, 8
      %s166 = scalar_lea.vmem %s0, %s165
      %s167 = smul.u32 2, %s14
      %s168 = smul.u32 2, %s14
      %p169 = scmp.lt.s32.totalorder %s168, 7
      %s170 = scalar_select %p169, %s168, 7
      %s171 = smul.addr %s170, 8
      %s172 = scalar_lea.vmem %s3, %s171
      %s173 = smul.u32 2, %s14
      %v174 = vld [vmem:[%s166] sm:$0xff]
      %v175 = vld [vmem:[%s166 + $0x8] sm:$0xff]
      %v176 = vld [vmem:[%s1] sm:$0x1]
      %v178 = vlaneseq
      %v179 = vshrl.u32 %v178, 7
      %v180 = vsub.s32 0, %v179
      %v181 = vrot.slane %v176, %v180
      %v183 = vmul.f32 %v174, %v181
      %v184 = vmul.f32 %v175, %v181
      %v185 = vld [vmem:[%s2] sm:$0x1f]
      %v186 = vlaneseq
      %v187 = vshrl.u32 %v186, 7
      %v188 = vsub.s32 4, %v187
      %v189 = vrot.slane %v185, %v188
      %vm190 = vcmask 130048
      %v191 = vsel %vm190, %v183, 0.0
      %192 = vadd.xlane.f32.xlu0 %v191
      %v193 = vpop.xlane.xlu0 %192
      %v194 = vsel %vm190, %v184, 0.0
      %195 = vadd.xlane.f32.xlu0 %v194
      %v196 = vpop.xlane.xlu0 %195
      %v197 = vmax.f32 %v193, 0.0
      %v198 = vmax.f32 %v196, 0.0
      %v199 = vlaneseq
      %v200 = vshrl.u32 %v199, 7
      %v201 = vsub.s32 0, %v200
      %v202 = vrot.slane %v185, %v201
      %v203 = vmul.f32 %v197, %v202
      %v204 = vmul.f32 %v198, %v202
      %v205 = vadd.f32 %v189, %v203
      %v206 = vadd.f32 %v189, %v204
      %209 = vrot.lane.b32.xlu0 %v183, 112
      %v210 = vpop.permute.xlu0 %209
      %211 = vrot.lane.b32.xlu0 %v184, 112
      %v212 = vpop.permute.xlu0 %211
      %v215 = vsel %vm190, %v210, 0.0
      %216 = vadd.xlane.f32.xlu0 %v215
      %v217 = vpop.xlane.xlu0 %216
      %v218 = vsel %vm190, %v212, 0.0
      %219 = vadd.xlane.f32.xlu0 %v218
      %v220 = vpop.xlane.xlu0 %219
      %v221 = vmax.f32 %v217, 0.0
      %v222 = vmax.f32 %v220, 0.0
      %v223 = vlaneseq
      %v224 = vshrl.u32 %v223, 7
      %v225 = vsub.s32 1, %v224
      %v226 = vrot.slane %v185, %v225
      %v227 = vmul.f32 %v221, %v226
      %v228 = vmul.f32 %v222, %v226
      %v229 = vadd.f32 %v205, %v227
      %v230 = vadd.f32 %v206, %v228
      %231 = vrot.lane.b32.xlu0 %v183, 96
      %v232 = vpop.permute.xlu0 %231
      %233 = vrot.lane.b32.xlu0 %v184, 96
      %v234 = vpop.permute.xlu0 %233
      %v237 = vsel %vm190, %v232, 0.0
      %238 = vadd.xlane.f32.xlu0 %v237
      %v239 = vpop.xlane.xlu0 %238
      %v240 = vsel %vm190, %v234, 0.0
      %241 = vadd.xlane.f32.xlu0 %v240
      %v242 = vpop.xlane.xlu0 %241
      %v243 = vmax.f32 %v239, 0.0
      %v244 = vmax.f32 %v242, 0.0
      %v245 = vlaneseq
      %v246 = vshrl.u32 %v245, 7
      %v247 = vsub.s32 2, %v246
      %v248 = vrot.slane %v185, %v247
      %v249 = vmul.f32 %v243, %v248
      %v250 = vmul.f32 %v244, %v248
      %v251 = vadd.f32 %v229, %v249
      %v252 = vadd.f32 %v230, %v250
      %253 = vrot.lane.b32.xlu0 %v183, 80
      %v254 = vpop.permute.xlu0 %253
      %255 = vrot.lane.b32.xlu0 %v184, 80
      %v256 = vpop.permute.xlu0 %255
      %v259 = vsel %vm190, %v254, 0.0
      %260 = vadd.xlane.f32.xlu0 %v259
      %v261 = vpop.xlane.xlu0 %260
      %v262 = vsel %vm190, %v256, 0.0
      %263 = vadd.xlane.f32.xlu0 %v262
      %v264 = vpop.xlane.xlu0 %263
      %v265 = vmax.f32 %v261, 0.0
      %v266 = vmax.f32 %v264, 0.0
      %v267 = vlaneseq
      %v268 = vshrl.u32 %v267, 7
      %v269 = vsub.s32 3, %v268
      %v270 = vrot.slane %v185, %v269
      %v271 = vmul.f32 %v265, %v270
      %v272 = vmul.f32 %v266, %v270
      %v273 = vadd.f32 %v251, %v271
      %v274 = vadd.f32 %v252, %v272
      %vm275 = vcmask 80896
      %v276 = vsel %vm275, %v273, -inf
      %277 = vmax.xlane.f32.xlu0 %v276
      %v278 = vpop.xlane.xlu0 %277
      %v279 = vsel %vm275, %v274, -inf
      %280 = vmax.xlane.f32.xlu0 %v279
      %v281 = vpop.xlane.xlu0 %280
      %v282 = vsub.f32 %v273, %v278
      %v283 = vsub.f32 %v274, %v281
      %v284 = vmul.f32 %v282, 1.442695
      %v285 = vpow.pop %v284
      %v286 = vmul.f32 %v283, 1.442695
      %v287 = vpow.pop %v286
      %v288 = vsel %vm275, %v285, 0.0
      %289 = vadd.xlane.f32.xlu0 %v288
      %v290 = vpop.xlane.xlu0 %289
      %v291 = vsel %vm275, %v287, 0.0
      %292 = vadd.xlane.f32.xlu0 %v291
      %v293 = vpop.xlane.xlu0 %292
      %v294 = vrcp.pop %v290
      %v295 = vrcp.pop %v293
      %v296 = vmul.f32 %v285, %v294
      %v297 = vmul.f32 %v287, %v295
      %298 = vst.msk [vmem:[%s172] sm:$0xff] %vm275, %v296
      %299 = vst.msk [vmem:[%s172 + $0x8] sm:$0xff] %vm275, %v297
      %s300 = smul.u32 2, %s14
      %p301 = scmp.lt.s32.totalorder %s300, 7
      %s302 = scalar_select %p301, %s300, 7
      %s303 = smul.addr %s302, 8
      %s304 = scalar_lea.vmem %s3, %s303
      // Predicated region
      $region33: #{convmod_forward.3} parent=31 // pred_check
        %p305 = pneg %p100
      $region34: #{convmod_forward.3} parent=31 // pred_check_branch
        %307 = sbr.rel (%p305) target = $region36
      $region35: #{convmod_forward.3} parent=31 // pred_region
        %s308 = smul.u32 2, %s14
      $region36: #{convmod_forward.3} parent=31 // pred_fallthru
        _
    $region32: #{convmod_forward.3} parent=5 // pred_fallthru
      _
    %p309 = scmp.le.s32.totalorder 2, %s9
    // Predicated region
    $region37: #{convmod_forward.3} parent=5 // pred_check
      %p310 = pneg %p309
    $region38: #{convmod_forward.3} parent=5 // pred_check_branch
      %312 = sbr.rel (%p310) target = $region40
    $region39: #{convmod_forward.3} parent=5 // pred_region
      %s313 = ssub.s32 %s9, 2
      // Predicated region
      $region41: #{convmod_forward.3} parent=39 // pred_check
        %p314 = pneg %p106
      $region42: #{convmod_forward.3} parent=39 // pred_check_branch
        %316 = sbr.rel (%p314) target = $region44
      $region43: #{convmod_forward.3} parent=39 // pred_region
        %s317 = smul.u32 2, %s15
        %p318 = scmp.lt.s32.totalorder %s317, 7
        %s319 = scalar_select %p318, %s317, 7
        %s320 = smul.addr %s319, 8
        %s321 = scalar_lea.vmem %s3, %s320
      $region44: #{convmod_forward.3} parent=39 // pred_fallthru
        _
    $region40: #{convmod_forward.3} parent=5 // pred_fallthru
      _
  $region6: #{convmod_forward.3} parent=0 // loop_footer
    %s13 = sadd.s32 1, %s9
  $region7: #{convmod_forward.3} parent=0 // loop_footer_branch
    %8 = sbr.rel target = $region3
  $region8: #{convmod_forward.3} parent=0 // loop_exit
    _

</llo_original>
